<compile_context>
chip_gen: v5e
topology: v5e:2x2
jax: 0.10.0
libtpu: 0.0.40
codegen_flags: <defaults>
</compile_context>

<pallas_src>
import jax
import jax.numpy as jnp
from jax.experimental import pallas as pl
from jax.experimental.pallas import tpu as pltpu


def _round_up(x, m):
    return (x + m - 1) // m * m


def _choose_block_batch(B, L):
    """Pick how many batch elements to pack per grid step."""
    target_rows = 256                      # aim for >= 256 MXU rows per step
    tb = max(1, min(B, target_rows // max(L, 1)))
    if B >= 2:
        tb = min(tb, max(1, B // 2))       # keep >= 2 grid steps (v7x: 2 TCs)
    while B % tb != 0:                     # keep TB a divisor of B (no batch pad)
        tb -= 1
    return tb


def _biaffine_kernel(rh_ref, rd_ref, whT_ref, bh_ref, wdT_ref, bd_ref, u_ref, s_ref):
    # rh_ref : (TB, Li, D)   packed batch of head activations (Li = L padded to x8)
    # rd_ref : (TB, Lj, D)   packed batch of dep activations  (Lj = L padded to x128)
    # whT/wdT: (D, D)        pre-transposed Linear weights (in, out)
    # bh/bd  : (1, D)
    # u_ref  : (D, O*D)      U flattened so all channels share one wide matmul
    # s_ref  : (TB, O, Li, Lj)
    TB, Li, D = rh_ref.shape
    Lj = rd_ref.shape[1]
    O = s_ref.shape[1]

    rh = rh_ref[...].reshape(TB * Li, D)
    rd = rd_ref[...].reshape(TB * Lj, D)

    # lab_head / lab_dep linear layers: x @ W^T + b  (weights already transposed)
    h = jnp.dot(rh, whT_ref[...], preferred_element_type=jnp.float32) + bh_ref[...]
    d = jnp.dot(rd, wdT_ref[...], preferred_element_type=jnp.float32) + bd_ref[...]

    # First bilinear matmul, all output channels fused into one wide MXU call:
    #   hU[r, o*D + q] = sum_p h[r, p] * U[o, p, q]
    hU = jnp.dot(h, u_ref[...], preferred_element_type=jnp.float32)  # (TB*Li, O*D)

    # Single transpose of d per grid step (hoisted out of the channel loop).
    dT = d.T  # (D, TB*Lj)

    for tb in range(TB):
        dT_b = dT[:, tb * Lj:(tb + 1) * Lj]                              # (D, Lj)
        for o in range(O):
            hU_bo = hU[tb * Li:(tb + 1) * Li, o * D:(o + 1) * D]         # (Li, D)
            s = jnp.dot(hU_bo, dT_b, preferred_element_type=jnp.float32)  # (Li, Lj)
            s_ref[tb, o] = s.astype(s_ref.dtype)


def biaffine_forward(Rh, Rd, params):
    """Rh, Rd: (B, L, D) float32. Returns (B, L, L) if output_dim==1 else (B, O, L, L)."""
    B, L, D = Rh.shape
    Wh, bh, Wd, bd, U = (params["Wh"], params["bh"], params["Wd"], params["bd"], params["U"])
    O = U.shape[0]

    # Padded sequence lengths: rows of S need x8 (sublane), cols need x128 (lane-dense stores).
    Li = _round_up(L, 8)
    Lj = _round_up(L, 128)
    TB = _choose_block_batch(B, L)
    grid = (B // TB,)

    Rh_p = jnp.pad(Rh, ((0, 0), (0, Li - L), (0, 0)))
    Rd_p = jnp.pad(Rd, ((0, 0), (0, Lj - L), (0, 0)))

    # Wrapper-side layout plumbing (one-time XLA ops, keeps the kernel transpose-free).
    WhT = Wh.T                                              # (D, D)
    WdT = Wd.T                                              # (D, D)
    U_flat = jnp.transpose(U, (1, 0, 2)).reshape(D, O * D)  # (D, O*D)

    flops = B * (2 * 2 * L * D * D + O * 2 * (L * D * D + L * L * D))
    bytes_accessed = 4 * (Rh_p.size + Rd_p.size + 2 * D * D + 2 * D
                          + D * O * D + B * O * Li * Lj)
    cost = pl.CostEstimate(flops=flops, transcendentals=0, bytes_accessed=bytes_accessed)

    # TODO(synk): for very large O*D*D (e.g. D=768, O=50), tile U over an extra
    # "arbitrary" output-channel grid axis so the working set fits v7x's 64 MiB VMEM.
    out = pl.pallas_call(
        _biaffine_kernel,
        out_shape=jax.ShapeDtypeStruct((B, O, Li, Lj), jnp.float32),
        grid_spec=pltpu.PrefetchScalarGridSpec(
            num_scalar_prefetch=0,
            grid=grid,
            in_specs=[
                pl.BlockSpec((TB, Li, D), lambda b: (b, 0, 0)),     # Rh (packed batch)
                pl.BlockSpec((TB, Lj, D), lambda b: (b, 0, 0)),     # Rd (packed batch)
                pl.BlockSpec((D, D), lambda b: (0, 0)),             # Wh^T
                pl.BlockSpec((1, D), lambda b: (0, 0)),             # bh
                pl.BlockSpec((D, D), lambda b: (0, 0)),             # Wd^T
                pl.BlockSpec((1, D), lambda b: (0, 0)),             # bd
                pl.BlockSpec((D, O * D), lambda b: (0, 0)),         # U flattened
            ],
            out_specs=pl.BlockSpec((TB, O, Li, Lj), lambda b: (b, 0, 0, 0)),
        ),
        compiler_params=pltpu.CompilerParams(dimension_semantics=("parallel",)),
        cost_estimate=cost,
    )(Rh_p, Rd_p, WhT, bh, WdT, bd, U_flat)

    out = out[:, :, :L, :L]    # strip sequence padding
    if O == 1:
        out = out[:, 0]        # torch .squeeze(1)
    return out


def init_params(key, input_dim, output_dim):
    """Deterministic synthetic init matching the torch module's parameter shapes."""
    D, O = input_dim, output_dim
    k1, k2, k3, k4, k5 = jax.random.split(key, 5)
    lin_bound = 1.0 / jnp.sqrt(D)
    Wh = jax.random.uniform(k1, (D, D), jnp.float32, -lin_bound, lin_bound)
    bh = jax.random.uniform(k2, (1, D), jnp.float32, -lin_bound, lin_bound)
    Wd = jax.random.uniform(k3, (D, D), jnp.float32, -lin_bound, lin_bound)
    bd = jax.random.uniform(k4, (1, D), jnp.float32, -lin_bound, lin_bound)
    xav_bound = jnp.sqrt(6.0 / (D * D + O * D))   # xavier_uniform for U (O, D, D)
    U = jax.random.uniform(k5, (O, D, D), jnp.float32, -xav_bound, xav_bound)
    return {"Wh": Wh, "bh": bh, "Wd": Wd, "bd": bd, "U": U}


def reference_forward(Rh, Rd, params):
    h = Rh @ params["Wh"].T + params["bh"][0]
    d = Rd @ params["Wd"].T + params["bd"][0]
    S = jnp.einsum("bip,opq,bjq->boij", h, params["U"], d)
    if params["U"].shape[0] == 1:
        S = S[:, 0]
    return S


def _check(B, L, D, O, seed):
    key = jax.random.PRNGKey(seed)
    kx, kh, kd = jax.random.split(key, 3)
    params = init_params(kx, D, O)
    Rh = jax.random.normal(kh, (B, L, D), jnp.float32)
    Rd = jax.random.normal(kd, (B, L, D), jnp.float32)

    S = jax.block_until_ready(biaffine_forward(Rh, Rd, params))
    S_ref = reference_forward(Rh, Rd, params)

    expect_shape = (B, L, L) if O == 1 else (B, O, L, L)
    assert S.shape == expect_shape, (S.shape, expect_shape)
    assert jnp.allclose(S, S_ref, atol=1e-3, rtol=1e-4), "mismatch vs reference"


if __name__ == "__main__":
    # Main config (matches the module at small shapes): output_dim == 1 -> squeeze.
    _check(B=2, L=8, D=32, O=1, seed=0)
    # Multi-channel config exercising the fused (D, O*D) matmul and batch packing.
    _check(B=4, L=8, D=32, O=3, seed=0)
    print("KERNEL_OK")
</pallas_src>

<mosaic_0001>
module attributes {stable_mosaic.version = 11 : i64} {
  func.func @_biaffine_kernel(%arg0: i32, %arg1: memref<1x8x32xf32, #tpu.memory_space<vmem>>, %arg2: memref<1x128x32xf32, #tpu.memory_space<vmem>>, %arg3: memref<32x32xf32, #tpu.memory_space<vmem>>, %arg4: memref<1x32xf32, #tpu.memory_space<vmem>>, %arg5: memref<32x32xf32, #tpu.memory_space<vmem>>, %arg6: memref<1x32xf32, #tpu.memory_space<vmem>>, %arg7: memref<32x32xf32, #tpu.memory_space<vmem>>, %arg8: memref<1x1x8x128xf32, #tpu.memory_space<vmem>>) attributes {dimension_semantics = [#tpu.dimension_semantics<parallel>], iteration_bounds = array<i64: 2>, scalar_prefetch = 0 : i64, scratch_operands = 0 : i64, tpu.core_type = #tpu.core_type<tc>, window_params = [{transform_indices = @transform_0, window_bounds = array<i64: 1, 8, 32>}, {transform_indices = @transform_1, window_bounds = array<i64: 1, 128, 32>}, {pipeline_mode = #tpu.pipeline_mode<synchronous>, transform_indices = @transform_2, window_bounds = array<i64: 32, 32>}, {pipeline_mode = #tpu.pipeline_mode<synchronous>, transform_indices = @transform_3, window_bounds = array<i64: 1, 32>}, {pipeline_mode = #tpu.pipeline_mode<synchronous>, transform_indices = @transform_4, window_bounds = array<i64: 32, 32>}, {pipeline_mode = #tpu.pipeline_mode<synchronous>, transform_indices = @transform_5, window_bounds = array<i64: 1, 32>}, {pipeline_mode = #tpu.pipeline_mode<synchronous>, transform_indices = @transform_6, window_bounds = array<i64: 32, 32>}, {transform_indices = @transform_7, window_bounds = array<i64: 1, 1, 8, 128>}]} {
    %c0 = arith.constant 0 : index
    %c0_0 = arith.constant 0 : index
    %c0_1 = arith.constant 0 : index
    %0 = vector.load %arg1[%c0, %c0_0, %c0_1] : memref<1x8x32xf32, #tpu.memory_space<vmem>>, vector<1x8x32xf32>
    %1 = vector.shape_cast %0 : vector<1x8x32xf32> to vector<8x32xf32>
    %c0_2 = arith.constant 0 : index
    %c0_3 = arith.constant 0 : index
    %c0_4 = arith.constant 0 : index
    %2 = vector.load %arg2[%c0_2, %c0_3, %c0_4] : memref<1x128x32xf32, #tpu.memory_space<vmem>>, vector<1x128x32xf32>
    %3 = vector.shape_cast %2 : vector<1x128x32xf32> to vector<128x32xf32>
    %c0_5 = arith.constant 0 : index
    %c0_6 = arith.constant 0 : index
    %4 = vector.load %arg3[%c0_5, %c0_6] : memref<32x32xf32, #tpu.memory_space<vmem>>, vector<32x32xf32>
    %cst = arith.constant dense<0.000000e+00> : vector<8x32xf32>
    %5 = tpu.matmul %1, %4, %cst {dimension_numbers = #tpu.dot_dimension_numbers<[1], [0], [0], [1], [0, 0, 1, 1], [], []>} : vector<8x32xf32>, vector<32x32xf32>, vector<8x32xf32> -> vector<8x32xf32>
    %c0_7 = arith.constant 0 : index
    %c0_8 = arith.constant 0 : index
    %6 = vector.load %arg4[%c0_7, %c0_8] : memref<1x32xf32, #tpu.memory_space<vmem>>, vector<1x32xf32>
    %7 = vector.broadcast %6 : vector<1x32xf32> to vector<8x32xf32>
    %8 = arith.addf %5, %7 : vector<8x32xf32>
    %c0_9 = arith.constant 0 : index
    %c0_10 = arith.constant 0 : index
    %9 = vector.load %arg5[%c0_9, %c0_10] : memref<32x32xf32, #tpu.memory_space<vmem>>, vector<32x32xf32>
    %cst_11 = arith.constant dense<0.000000e+00> : vector<128x32xf32>
    %10 = tpu.matmul %3, %9, %cst_11 {dimension_numbers = #tpu.dot_dimension_numbers<[1], [0], [0], [1], [0, 0, 1, 1], [], []>} : vector<128x32xf32>, vector<32x32xf32>, vector<128x32xf32> -> vector<128x32xf32>
    %c0_12 = arith.constant 0 : index
    %c0_13 = arith.constant 0 : index
    %11 = vector.load %arg6[%c0_12, %c0_13] : memref<1x32xf32, #tpu.memory_space<vmem>>, vector<1x32xf32>
    %12 = vector.broadcast %11 : vector<1x32xf32> to vector<128x32xf32>
    %13 = arith.addf %10, %12 : vector<128x32xf32>
    %c0_14 = arith.constant 0 : index
    %c0_15 = arith.constant 0 : index
    %14 = vector.load %arg7[%c0_14, %c0_15] : memref<32x32xf32, #tpu.memory_space<vmem>>, vector<32x32xf32>
    %cst_16 = arith.constant dense<0.000000e+00> : vector<8x32xf32>
    %15 = tpu.matmul %8, %14, %cst_16 {dimension_numbers = #tpu.dot_dimension_numbers<[1], [0], [0], [1], [0, 0, 1, 1], [], []>} : vector<8x32xf32>, vector<32x32xf32>, vector<8x32xf32> -> vector<8x32xf32>
    %16 = tpu.transpose %13, [1, 0] : vector<128x32xf32> -> vector<32x128xf32>
    %cst_17 = arith.constant dense<0.000000e+00> : vector<8x128xf32>
    %17 = tpu.matmul %15, %16, %cst_17 {dimension_numbers = #tpu.dot_dimension_numbers<[1], [0], [0], [1], [0, 0, 1, 1], [], []>} : vector<8x32xf32>, vector<32x128xf32>, vector<8x128xf32> -> vector<8x128xf32>
    %c0_18 = arith.constant 0 : index
    %c0_19 = arith.constant 0 : index
    %c0_20 = arith.constant 0 : index
    %c0_21 = arith.constant 0 : index
    %18 = vector.load %arg8[%c0_18, %c0_19, %c0_20, %c0_21] : memref<1x1x8x128xf32, #tpu.memory_space<vmem>>, vector<1x1x8x128xf32>
    %19 = vector.shape_cast %18 : vector<1x1x8x128xf32> to vector<8x128xf32>
    %20 = vector.shape_cast %17 : vector<8x128xf32> to vector<1x1x8x128xf32>
    tpu.vector_store %arg8[%c0_18, %c0_19, %c0_20, %c0_21], %20 {strides = array<i32>} : memref<1x1x8x128xf32, #tpu.memory_space<vmem>>, vector<1x1x8x128xf32>,
    return
  }
  func.func @transform_0(%arg0: i32) -> (i32, i32, i32) {
    %c0_i32 = arith.constant 0 : i32
    %c0_i32_0 = arith.constant 0 : i32
    %c0_i32_1 = arith.constant 0 : i32
    return %arg0, %c0_i32, %c0_i32_0 : i32, i32, i32
  }
  func.func @transform_1(%arg0: i32) -> (i32, i32, i32) {
    %c0_i32 = arith.constant 0 : i32
    %c0_i32_0 = arith.constant 0 : i32
    %c0_i32_1 = arith.constant 0 : i32
    return %arg0, %c0_i32, %c0_i32_0 : i32, i32, i32
  }
  func.func @transform_2(%arg0: i32) -> (i32, i32) {
    %c0_i32 = arith.constant 0 : i32
    %c0_i32_0 = arith.constant 0 : i32
    %c0_i32_1 = arith.constant 0 : i32
    return %c0_i32, %c0_i32_0 : i32, i32
  }
  func.func @transform_3(%arg0: i32) -> (i32, i32) {
    %c0_i32 = arith.constant 0 : i32
    %c0_i32_0 = arith.constant 0 : i32
    %c0_i32_1 = arith.constant 0 : i32
    return %c0_i32, %c0_i32_0 : i32, i32
  }
  func.func @transform_4(%arg0: i32) -> (i32, i32) {
    %c0_i32 = arith.constant 0 : i32
    %c0_i32_0 = arith.constant 0 : i32
    %c0_i32_1 = arith.constant 0 : i32
    return %c0_i32, %c0_i32_0 : i32, i32
  }
  func.func @transform_5(%arg0: i32) -> (i32, i32) {
    %c0_i32 = arith.constant 0 : i32
    %c0_i32_0 = arith.constant 0 : i32
    %c0_i32_1 = arith.constant 0 : i32
    return %c0_i32, %c0_i32_0 : i32, i32
  }
  func.func @transform_6(%arg0: i32) -> (i32, i32) {
    %c0_i32 = arith.constant 0 : i32
    %c0_i32_0 = arith.constant 0 : i32
    %c0_i32_1 = arith.constant 0 : i32
    return %c0_i32, %c0_i32_0 : i32, i32
  }
  func.func @transform_7(%arg0: i32) -> (i32, i32, i32, i32) {
    %c0_i32 = arith.constant 0 : i32
    %c0_i32_0 = arith.constant 0 : i32
    %c0_i32_1 = arith.constant 0 : i32
    %c0_i32_2 = arith.constant 0 : i32
    return %arg0, %c0_i32, %c0_i32_0, %c0_i32_1 : i32, i32, i32, i32
  }
}

</mosaic_0001>

<llo_original>
// kernel: tpu_custom_call.1
$region0: #{tpu_custom_call.1}
  #allocation0 [shape = 'u32[]', space=smem, size = 0x4, offset = 0x4, fixed_abs, tag = 'smem constant byte address 0x4 - core index']
  #allocation1 [shape = 'u32[72,128]{1,0:T(1,128)}', space=vmem, size = 0x9000, scoped, tag = 'internal scratch']
  %s0 = inlined_call_operand.vmem [shape: f32[2,8,32], index: 0, kind: input, shape index: {}]
  %s1 = inlined_call_operand.vmem [shape: f32[2,128,32], index: 1, kind: input, shape index: {}]
  %s2 = inlined_call_operand.vmem [shape: f32[32,32], index: 2, kind: input, shape index: {}]
  %s3 = inlined_call_operand.vmem [shape: f32[1,32], index: 3, kind: input, shape index: {}]
  %s4 = inlined_call_operand.vmem [shape: f32[32,32], index: 4, kind: input, shape index: {}]
  %s5 = inlined_call_operand.vmem [shape: f32[1,32], index: 5, kind: input, shape index: {}]
  %s6 = inlined_call_operand.vmem [shape: f32[32,32], index: 6, kind: input, shape index: {}]
  %s7 = inlined_call_operand.hbm [shape: f32[2,1,8,128], index: 7, kind: output, shape index: {}]
  %s8 = sld [smem:[#allocation0]]
  $region61: #{tpu_custom_call.1} parent=0
    _
  %s10 = ssub.s32 1, %s8
  %s11 = scalar_select 0, %s10, %s8
  $region1: #{tpu_custom_call.1} parent=0
    #allocation2 [shape = 'u8[8192]{0}', space=vmem, size = 0x2000, scoped, tag = 'output window, operand 0']
    #allocation3 [shape = 's32[2]{0}', space=sflag, size = 0x8, scoped, tag = 'scoped memory for tpu_custom_call.1']
    %12 = vsyncpa [#allocation3], 0
    %s13 = scalar_lea.sflag [#allocation3], 1
    %14 = vsyncpa %s13, 0
    loop: start=0, step=1, limit=4
    $region2: #{tpu_custom_call.1} parent=1 // loop_pre_header
      _
    $region3: #{tpu_custom_call.1} parent=1 // loop_header
      %s16 = sphi 0, %s20
      %p17 = scmp.ge.s32.totalorder %s16, 4
      %s26 = sphi 0, %s28
      %s29 = sphi 0, %s26
      %s30 = sphi 0, %s29
      %s46 = sphi 0, %s30
      %s52 = sphi 0, %s54
      %s55 = sphi 0, %s52
      %s56 = sphi 0, %s55
      %s72 = sphi 0, %s56
      %s76 = sphi 0, %s76
      %s78 = sphi 0, %s76
      %s79 = sphi 0, %s78
      %s93 = sphi 0, %s79
      %s97 = sphi 0, %s97
      %s99 = sphi 0, %s97
      %s100 = sphi 0, %s99
      %s114 = sphi 0, %s100
      %s118 = sphi 0, %s118
      %s120 = sphi 0, %s118
      %s121 = sphi 0, %s120
      %s135 = sphi 0, %s121
      %s139 = sphi 0, %s139
      %s141 = sphi 0, %s139
      %s142 = sphi 0, %s141
      %s156 = sphi 0, %s142
      %s160 = sphi 0, %s160
      %s162 = sphi 0, %s160
      %s163 = sphi 0, %s162
      %s177 = sphi 0, %s163
      %s183 = sphi 0, %s185
      %s186 = sphi 0, %s183
      %s187 = sphi 0, %s186
      %s203 = sphi 0, %s187
    $region4: #{tpu_custom_call.1} parent=1 // loop_header_branch
      %19 = sbr.rel (%p17) target = $region8
    $region5: #{tpu_custom_call.1} parent=1 // loop_body
      %s21 = ssub.s32 %s16, 1
      %s22 = ssub.s32 %s16, 2
      %s23 = sadd.s32 %s16, 1
      %s24 = ssub.s32 %s16, %s23
      %p25 = scmp.eq.s32.totalorder %s24, 0
      %s27 = sadd.s32 %s26, 1
      %s28 = scalar_select %p25, %s26, %s27
      %p31 = pneg %p25
      %p32 = scmp.eq.s32.totalorder %s16, 1
      %p33 = por %p31, %p32
      %p34 = scmp.ne.s32.totalorder %s26, %s29
      %p35 = scmp.eq.s32.totalorder %s16, 0
      %p36 = por %p34, %p35
      %p37 = scmp.ne.s32.totalorder %s26, %s29
      %p38 = scmp.eq.s32.totalorder %s21, 1
      %p39 = por %p37, %p38
      %p40 = scmp.ne.s32.totalorder %s29, %s30
      %p41 = scmp.eq.s32.totalorder %s21, 0
      %p42 = por %p40, %p41
      %p43 = scmp.ne.s32.totalorder %s29, %s30
      %p44 = scmp.eq.s32.totalorder %s22, 1
      %p45 = por %p43, %p44
      %p47 = scmp.ne.s32.totalorder %s30, %s46
      %p48 = scmp.eq.s32.totalorder %s22, 0
      %p49 = por %p47, %p48
      %s50 = ssub.s32 %s16, %s23
      %p51 = scmp.eq.s32.totalorder %s50, 0
      %s53 = sadd.s32 %s52, 1
      %s54 = scalar_select %p51, %s52, %s53
      %p57 = pneg %p51
      %p58 = scmp.eq.s32.totalorder %s16, 1
      %p59 = por %p57, %p58
      %p60 = scmp.ne.s32.totalorder %s52, %s55
      %p61 = scmp.eq.s32.totalorder %s16, 0
      %p62 = por %p60, %p61
      %p63 = scmp.ne.s32.totalorder %s52, %s55
      %p64 = scmp.eq.s32.totalorder %s21, 1
      %p65 = por %p63, %p64
      %p66 = scmp.ne.s32.totalorder %s55, %s56
      %p67 = scmp.eq.s32.totalorder %s21, 0
      %p68 = por %p66, %p67
      %p69 = scmp.ne.s32.totalorder %s55, %s56
      %p70 = scmp.eq.s32.totalorder %s22, 1
      %p71 = por %p69, %p70
      %p73 = scmp.ne.s32.totalorder %s56, %s72
      %p74 = scmp.eq.s32.totalorder %s22, 0
      %p75 = por %p73, %p74
      %s77 = sadd.s32 %s76, 1
      %p80 = scmp.eq.s32.totalorder %s16, 1
      %p81 = scmp.ne.s32.totalorder %s76, %s78
      %p82 = scmp.eq.s32.totalorder %s16, 0
      %p83 = por %p81, %p82
      %p84 = scmp.ne.s32.totalorder %s76, %s78
      %p85 = scmp.eq.s32.totalorder %s21, 1
      %p86 = por %p84, %p85
      %p87 = scmp.ne.s32.totalorder %s78, %s79
      %p88 = scmp.eq.s32.totalorder %s21, 0
      %p89 = por %p87, %p88
      %p90 = scmp.ne.s32.totalorder %s78, %s79
      %p91 = scmp.eq.s32.totalorder %s22, 1
      %p92 = por %p90, %p91
      %p94 = scmp.ne.s32.totalorder %s79, %s93
      %p95 = scmp.eq.s32.totalorder %s22, 0
      %p96 = por %p94, %p95
      %s98 = sadd.s32 %s97, 1
      %p101 = scmp.eq.s32.totalorder %s16, 1
      %p102 = scmp.ne.s32.totalorder %s97, %s99
      %p103 = scmp.eq.s32.totalorder %s16, 0
      %p104 = por %p102, %p103
      %p105 = scmp.ne.s32.totalorder %s97, %s99
      %p106 = scmp.eq.s32.totalorder %s21, 1
      %p107 = por %p105, %p106
      %p108 = scmp.ne.s32.totalorder %s99, %s100
      %p109 = scmp.eq.s32.totalorder %s21, 0
      %p110 = por %p108, %p109
      %p111 = scmp.ne.s32.totalorder %s99, %s100
      %p112 = scmp.eq.s32.totalorder %s22, 1
      %p113 = por %p111, %p112
      %p115 = scmp.ne.s32.totalorder %s100, %s114
      %p116 = scmp.eq.s32.totalorder %s22, 0
      %p117 = por %p115, %p116
      %s119 = sadd.s32 %s118, 1
      %p122 = scmp.eq.s32.totalorder %s16, 1
      %p123 = scmp.ne.s32.totalorder %s118, %s120
      %p124 = scmp.eq.s32.totalorder %s16, 0
      %p125 = por %p123, %p124
      %p126 = scmp.ne.s32.totalorder %s118, %s120
      %p127 = scmp.eq.s32.totalorder %s21, 1
      %p128 = por %p126, %p127
      %p129 = scmp.ne.s32.totalorder %s120, %s121
      %p130 = scmp.eq.s32.totalorder %s21, 0
      %p131 = por %p129, %p130
      %p132 = scmp.ne.s32.totalorder %s120, %s121
      %p133 = scmp.eq.s32.totalorder %s22, 1
      %p134 = por %p132, %p133
      %p136 = scmp.ne.s32.totalorder %s121, %s135
      %p137 = scmp.eq.s32.totalorder %s22, 0
      %p138 = por %p136, %p137
      %s140 = sadd.s32 %s139, 1
      %p143 = scmp.eq.s32.totalorder %s16, 1
      %p144 = scmp.ne.s32.totalorder %s139, %s141
      %p145 = scmp.eq.s32.totalorder %s16, 0
      %p146 = por %p144, %p145
      %p147 = scmp.ne.s32.totalorder %s139, %s141
      %p148 = scmp.eq.s32.totalorder %s21, 1
      %p149 = por %p147, %p148
      %p150 = scmp.ne.s32.totalorder %s141, %s142
      %p151 = scmp.eq.s32.totalorder %s21, 0
      %p152 = por %p150, %p151
      %p153 = scmp.ne.s32.totalorder %s141, %s142
      %p154 = scmp.eq.s32.totalorder %s22, 1
      %p155 = por %p153, %p154
      %p157 = scmp.ne.s32.totalorder %s142, %s156
      %p158 = scmp.eq.s32.totalorder %s22, 0
      %p159 = por %p157, %p158
      %s161 = sadd.s32 %s160, 1
      %p164 = scmp.eq.s32.totalorder %s16, 1
      %p165 = scmp.ne.s32.totalorder %s160, %s162
      %p166 = scmp.eq.s32.totalorder %s16, 0
      %p167 = por %p165, %p166
      %p168 = scmp.ne.s32.totalorder %s160, %s162
      %p169 = scmp.eq.s32.totalorder %s21, 1
      %p170 = por %p168, %p169
      %p171 = scmp.ne.s32.totalorder %s162, %s163
      %p172 = scmp.eq.s32.totalorder %s21, 0
      %p173 = por %p171, %p172
      %p174 = scmp.ne.s32.totalorder %s162, %s163
      %p175 = scmp.eq.s32.totalorder %s22, 1
      %p176 = por %p174, %p175
      %p178 = scmp.ne.s32.totalorder %s163, %s177
      %p179 = scmp.eq.s32.totalorder %s22, 0
      %p180 = por %p178, %p179
      %s181 = ssub.s32 %s16, %s23
      %p182 = scmp.eq.s32.totalorder %s181, 0
      %s184 = sadd.s32 %s183, 1
      %s185 = scalar_select %p182, %s183, %s184
      %p188 = pneg %p182
      %p189 = scmp.eq.s32.totalorder %s16, 1
      %p190 = por %p188, %p189
      %p191 = scmp.ne.s32.totalorder %s183, %s186
      %p192 = scmp.eq.s32.totalorder %s16, 0
      %p193 = por %p191, %p192
      %p194 = scmp.ne.s32.totalorder %s183, %s186
      %p195 = scmp.eq.s32.totalorder %s21, 1
      %p196 = por %p194, %p195
      %p197 = scmp.ne.s32.totalorder %s186, %s187
      %p198 = scmp.eq.s32.totalorder %s21, 0
      %p199 = por %p197, %p198
      %p200 = scmp.ne.s32.totalorder %s186, %s187
      %p201 = scmp.eq.s32.totalorder %s22, 1
      %p202 = por %p200, %p201
      %p204 = scmp.ne.s32.totalorder %s187, %s203
      %p205 = scmp.eq.s32.totalorder %s22, 0
      %p206 = por %p204, %p205
      %p207 = scmp.le.s32.totalorder 1, %s16
      %p208 = scmp.lt.s32.totalorder %s16, 3
      %p209 = pnand %p207, %p208
      %p210 = pneg %p209
      // Predicated region
      $region9: #{tpu_custom_call.1} parent=5 // pred_check
        _
      $region10: #{tpu_custom_call.1} parent=5 // pred_check_branch
        %212 = sbr.rel (%p209) target = $region12
      $region11: #{tpu_custom_call.1} parent=5 // pred_region
        %s213 = ssub.s32 %s16, 1
        // Predicated region
        $region13: #{tpu_custom_call.1} parent=11 // pred_check
          %p214 = pneg %p89
        $region14: #{tpu_custom_call.1} parent=11 // pred_check_branch
          %216 = sbr.rel (%p214) target = $region16
        $region15: #{tpu_custom_call.1} parent=11 // pred_region
          _
        $region16: #{tpu_custom_call.1} parent=11 // pred_fallthru
          _
        // Predicated region
        $region17: #{tpu_custom_call.1} parent=11 // pred_check
          %p217 = pneg %p110
        $region18: #{tpu_custom_call.1} parent=11 // pred_check_branch
          %219 = sbr.rel (%p217) target = $region20
        $region19: #{tpu_custom_call.1} parent=11 // pred_region
          _
        $region20: #{tpu_custom_call.1} parent=11 // pred_fallthru
          _
        // Predicated region
        $region21: #{tpu_custom_call.1} parent=11 // pred_check
          %p220 = pneg %p131
        $region22: #{tpu_custom_call.1} parent=11 // pred_check_branch
          %222 = sbr.rel (%p220) target = $region24
        $region23: #{tpu_custom_call.1} parent=11 // pred_region
          _
        $region24: #{tpu_custom_call.1} parent=11 // pred_fallthru
          _
        // Predicated region
        $region25: #{tpu_custom_call.1} parent=11 // pred_check
          %p223 = pneg %p152
        $region26: #{tpu_custom_call.1} parent=11 // pred_check_branch
          %225 = sbr.rel (%p223) target = $region28
        $region27: #{tpu_custom_call.1} parent=11 // pred_region
          _
        $region28: #{tpu_custom_call.1} parent=11 // pred_fallthru
          _
        // Predicated region
        $region29: #{tpu_custom_call.1} parent=11 // pred_check
          %p226 = pneg %p173
        $region30: #{tpu_custom_call.1} parent=11 // pred_check_branch
          %228 = sbr.rel (%p226) target = $region32
        $region31: #{tpu_custom_call.1} parent=11 // pred_region
          _
        $region32: #{tpu_custom_call.1} parent=11 // pred_fallthru
          _
      $region12: #{tpu_custom_call.1} parent=5 // pred_fallthru
        _
      %p229 = scmp.lt.s32.totalorder %s16, 2
      // Predicated region
      $region33: #{tpu_custom_call.1} parent=5 // pred_check
        %p230 = pneg %p229
      $region34: #{tpu_custom_call.1} parent=5 // pred_check_branch
        %232 = sbr.rel (%p230) target = $region36
      $region35: #{tpu_custom_call.1} parent=5 // pred_region
        // Predicated region
        $region37: #{tpu_custom_call.1} parent=35 // pred_check
          %p233 = pneg %p36
        $region38: #{tpu_custom_call.1} parent=35 // pred_check_branch
          %235 = sbr.rel (%p233) target = $region40
        $region39: #{tpu_custom_call.1} parent=35 // pred_region
          %p236 = scmp.lt.s32.totalorder %s16, 1
          %s237 = scalar_select %p236, %s16, 1
          %s238 = smul.addr %s237, 8
          %s239 = scalar_lea.vmem %s0, %s238
        $region40: #{tpu_custom_call.1} parent=35 // pred_fallthru
          _
        // Predicated region
        $region41: #{tpu_custom_call.1} parent=35 // pred_check
          %p240 = pneg %p62
        $region42: #{tpu_custom_call.1} parent=35 // pred_check_branch
          %242 = sbr.rel (%p240) target = $region44
        $region43: #{tpu_custom_call.1} parent=35 // pred_region
          %p243 = scmp.lt.s32.totalorder %s16, 1
          %s244 = scalar_select %p243, %s16, 1
          %s245 = smul.addr %s244, 16
          %s246 = smul.addr %s245, 8
          %s247 = scalar_lea.vmem %s1, %s246
        $region44: #{tpu_custom_call.1} parent=35 // pred_fallthru
          _
      $region36: #{tpu_custom_call.1} parent=5 // pred_fallthru
        _
      %p248 = scmp.le.s32.totalorder 1, %s16
      %p249 = scmp.lt.s32.totalorder %s16, 3
      %p250 = pnand %p248, %p249
      %p251 = pneg %p250
      // Predicated region
      $region45: #{tpu_custom_call.1} parent=5 // pred_check
        _
      $region46: #{tpu_custom_call.1} parent=5 // pred_check_branch
        %253 = sbr.rel (%p250) target = $region48
      $region47: #{tpu_custom_call.1} parent=5 // pred_region
        %s254 = ssub.s32 %s16, 1
        %p255 = scmp.lt.s32.totalorder %s21, 1
        %s256 = scalar_select %p255, %s21, 1
        %s257 = smul.addr %s256, 8
        %s258 = scalar_lea.vmem %s0, %s257
        %p259 = pneg %p42
        %p260 = pneg %p39
        %p261 = scmp.lt.s32.totalorder %s21, 1
        %s262 = scalar_select %p261, %s21, 1
        %s263 = smul.addr %s262, 16
        %s264 = smul.addr %s263, 8
        %s265 = scalar_lea.vmem %s1, %s264
        %p266 = pneg %p68
        %p267 = pneg %p65
        %p268 = pneg %p89
        %p269 = pneg %p86
        %p270 = pneg %p110
        %p271 = pneg %p107
        %p272 = pneg %p131
        %p273 = pneg %p128
        %p274 = pneg %p152
        %p275 = pneg %p149
        %p276 = pneg %p173
        %p277 = pneg %p170
        %p278 = pneg %p199
        %p279 = pneg %p196
        %s280 = sand.u32 %s186, 1
        %s281 = scalar_lea.sflag [#allocation3], %s280
        %s282 = sand.u32 %s186, 1
        %s283 = smul.addr %s282, 8
        %s284 = scalar_lea.vmem [#allocation2], %s283
        %p285 = scmp.lt.s32.totalorder %s21, 1
        %s286 = scalar_select %p285, %s21, 1
        %s287 = smul.addr %s286, 8
        %s288 = scalar_lea.vmem %s0, %s287
        %p289 = scmp.lt.s32.totalorder %s21, 1
        %s290 = scalar_select %p289, %s21, 1
        %s291 = smul.addr %s290, 16
        %s292 = smul.addr %s291, 8
        %s293 = scalar_lea.vmem %s1, %s292
        %v294 = vld [vmem:[%s288] sm:$0xff]
        %v295 = vld [vmem:[%s293] sm:$0xff]
        %v296 = vld [vmem:[%s293 + $0x8] sm:$0xff]
        %v297 = vld [vmem:[%s293 + $0x10] sm:$0xff]
        %v298 = vld [vmem:[%s293 + $0x18] sm:$0xff]
        %v299 = vld [vmem:[%s293 + $0x20] sm:$0xff]
        %v300 = vld [vmem:[%s293 + $0x28] sm:$0xff]
        %v301 = vld [vmem:[%s293 + $0x30] sm:$0xff]
        %v302 = vld [vmem:[%s293 + $0x38] sm:$0xff]
        %v303 = vld [vmem:[%s293 + $0x40] sm:$0xff]
        %v304 = vld [vmem:[%s293 + $0x48] sm:$0xff]
        %v305 = vld [vmem:[%s293 + $0x50] sm:$0xff]
        %v306 = vld [vmem:[%s293 + $0x58] sm:$0xff]
        %v307 = vld [vmem:[%s293 + $0x60] sm:$0xff]
        %v308 = vld [vmem:[%s293 + $0x68] sm:$0xff]
        %v309 = vld [vmem:[%s293 + $0x70] sm:$0xff]
        %v310 = vld [vmem:[%s293 + $0x78] sm:$0xff]
        %v311 = vld [vmem:[%s2] sm:$0xff]
        %v312 = vld [vmem:[%s2 + $0x8] sm:$0xff]
        %v313 = vld [vmem:[%s2 + $0x10] sm:$0xff]
        %v314 = vld [vmem:[%s2 + $0x18] sm:$0xff]
        %v315 = vld [vmem:[%s3] sm:$0x1]
        %v317 = vperm.slane %v315, 0
        %vm319 = vcmask 261120
        %v321 = vsel %vm319, %v294, 0
        %323 = vmatpush.msra.mxu0 0.0
        %324 = vmatpush.msra.mxu0 0.0
        %325 = vmatpush.msra.mxu0 0.0
        %326 = vmatpush.msra.mxu0 0.0
        %327 = vmatpush.msra.mxu0 0.0
        %328 = vmatpush.msra.mxu0 0.0
        %329 = vmatpush.msra.mxu0 0.0
        %330 = vmatpush.msra.mxu0 0.0
        %331 = vmatpush.msra.mxu0 0.0
        %332 = vmatpush.msra.mxu0 0.0
        %333 = vmatpush.msra.mxu0 0.0
        %334 = vmatpush.msra.mxu0 0.0
        %335 = vmatpush.msra.mxu0 %v314
        %336 = vmatpush.msra.mxu0 %v313
        %337 = vmatpush.msra.mxu0 %v312
        %338 = vmatpush.msra.mxu0 %v311
        %339 = vmatmul.f32.gmra.mxu0 %v321
        %v340 = vpop.f32.mrf.mxu0
        %v341 = vadd.f32 %v317, %v340
        %342 = vdwg.mxu0
        %v343 = vld [vmem:[%s4] sm:$0xff]
        %v344 = vld [vmem:[%s4 + $0x8] sm:$0xff]
        %v345 = vld [vmem:[%s4 + $0x10] sm:$0xff]
        %v346 = vld [vmem:[%s4 + $0x18] sm:$0xff]
        %v347 = vld [vmem:[%s5] sm:$0x1]
        %v349 = vperm.slane %v347, 0
        %v352 = vsel %vm319, %v295, 0
        %v355 = vsel %vm319, %v296, 0
        %v358 = vsel %vm319, %v297, 0
        %v361 = vsel %vm319, %v298, 0
        %v364 = vsel %vm319, %v299, 0
        %v367 = vsel %vm319, %v300, 0
        %v370 = vsel %vm319, %v301, 0
        %v373 = vsel %vm319, %v302, 0
        %v376 = vsel %vm319, %v303, 0
        %v379 = vsel %vm319, %v304, 0
        %v382 = vsel %vm319, %v305, 0
        %v385 = vsel %vm319, %v306, 0
        %v388 = vsel %vm319, %v307, 0
        %v391 = vsel %vm319, %v308, 0
        %v394 = vsel %vm319, %v309, 0
        %v397 = vsel %vm319, %v310, 0
        %399 = vmatpush.msra.mxu0 0.0
        %400 = vmatpush.msra.mxu0 0.0
        %401 = vmatpush.msra.mxu0 0.0
        %402 = vmatpush.msra.mxu0 0.0
        %403 = vmatpush.msra.mxu0 0.0
        %404 = vmatpush.msra.mxu0 0.0
        %405 = vmatpush.msra.mxu0 0.0
        %406 = vmatpush.msra.mxu0 0.0
        %407 = vmatpush.msra.mxu0 0.0
        %408 = vmatpush.msra.mxu0 0.0
        %409 = vmatpush.msra.mxu0 0.0
        %410 = vmatpush.msra.mxu0 0.0
        %411 = vmatpush.msra.mxu0 %v346
        %412 = vmatpush.msra.mxu0 %v345
        %413 = vmatpush.msra.mxu0 %v344
        %414 = vmatpush.msra.mxu0 %v343
        %415 = vmatmul.f32.gmra.mxu0 %v352
        %v416 = vpop.f32.mrf.mxu0
        %v417 = vadd.f32 %v349, %v416
        %418 = vmatmul.f32.gmra.mxu0 %v355
        %v419 = vpop.f32.mrf.mxu0
        %v420 = vadd.f32 %v349, %v419
        %421 = vmatmul.f32.gmra.mxu0 %v358
        %v422 = vpop.f32.mrf.mxu0
        %v423 = vadd.f32 %v349, %v422
        %424 = vmatmul.f32.gmra.mxu0 %v361
        %v425 = vpop.f32.mrf.mxu0
        %v426 = vadd.f32 %v349, %v425
        %427 = vmatmul.f32.gmra.mxu0 %v364
        %v428 = vpop.f32.mrf.mxu0
        %v429 = vadd.f32 %v349, %v428
        %430 = vmatmul.f32.gmra.mxu0 %v367
        %v431 = vpop.f32.mrf.mxu0
        %v432 = vadd.f32 %v349, %v431
        %433 = vmatmul.f32.gmra.mxu0 %v370
        %v434 = vpop.f32.mrf.mxu0
        %v435 = vadd.f32 %v349, %v434
        %436 = vmatmul.f32.gmra.mxu0 %v373
        %v437 = vpop.f32.mrf.mxu0
        %v438 = vadd.f32 %v349, %v437
        %439 = vmatmul.f32.gmra.mxu0 %v376
        %v440 = vpop.f32.mrf.mxu0
        %v441 = vadd.f32 %v349, %v440
        %442 = vmatmul.f32.gmra.mxu0 %v379
        %v443 = vpop.f32.mrf.mxu0
        %v444 = vadd.f32 %v349, %v443
        %445 = vmatmul.f32.gmra.mxu0 %v382
        %v446 = vpop.f32.mrf.mxu0
        %v447 = vadd.f32 %v349, %v446
        %448 = vmatmul.f32.gmra.mxu0 %v385
        %v449 = vpop.f32.mrf.mxu0
        %v450 = vadd.f32 %v349, %v449
        %451 = vmatmul.f32.gmra.mxu0 %v388
        %v452 = vpop.f32.mrf.mxu0
        %v453 = vadd.f32 %v349, %v452
        %454 = vmatmul.f32.gmra.mxu0 %v391
        %v455 = vpop.f32.mrf.mxu0
        %v456 = vadd.f32 %v349, %v455
        %457 = vmatmul.f32.gmra.mxu0 %v394
        %v458 = vpop.f32.mrf.mxu0
        %v459 = vadd.f32 %v349, %v458
        %460 = vmatmul.f32.gmra.mxu0 %v397
        %v461 = vpop.f32.mrf.mxu0
        %v462 = vadd.f32 %v349, %v461
        %463 = vdwg.mxu0
        %v464 = vld [vmem:[%s6] sm:$0xff]
        %v465 = vld [vmem:[%s6 + $0x8] sm:$0xff]
        %v466 = vld [vmem:[%s6 + $0x10] sm:$0xff]
        %v467 = vld [vmem:[%s6 + $0x18] sm:$0xff]
        %v469 = vsel %vm319, %v341, 0
        %471 = vmatpush.msra.mxu0 0.0
        %472 = vmatpush.msra.mxu0 0.0
        %473 = vmatpush.msra.mxu0 0.0
        %474 = vmatpush.msra.mxu0 0.0
        %475 = vmatpush.msra.mxu0 0.0
        %476 = vmatpush.msra.mxu0 0.0
        %477 = vmatpush.msra.mxu0 0.0
        %478 = vmatpush.msra.mxu0 0.0
        %479 = vmatpush.msra.mxu0 0.0
        %480 = vmatpush.msra.mxu0 0.0
        %481 = vmatpush.msra.mxu0 0.0
        %482 = vmatpush.msra.mxu0 0.0
        %483 = vmatpush.msra.mxu0 %v467
        %484 = vmatpush.msra.mxu0 %v466
        %485 = vmatpush.msra.mxu0 %v465
        %486 = vmatpush.msra.mxu0 %v464
        %487 = vmatmul.f32.gmra.mxu0 %v469
        %v488 = vpop.f32.mrf.mxu0
        %v489 = vadd.f32 0.0, %v488
        %490 = vdwg.mxu0
        %v492 = vsel %vm319, %v489, 0
        %v495 = vsel %vm319, %v417, 0
        %v498 = vsel %vm319, %v420, 0
        %v501 = vsel %vm319, %v423, 0
        %v504 = vsel %vm319, %v426, 0
        %v507 = vsel %vm319, %v429, 0
        %v510 = vsel %vm319, %v432, 0
        %v513 = vsel %vm319, %v435, 0
        %v516 = vsel %vm319, %v438, 0
        %v519 = vsel %vm319, %v441, 0
        %v522 = vsel %vm319, %v444, 0
        %v525 = vsel %vm319, %v447, 0
        %v528 = vsel %vm319, %v450, 0
        %v531 = vsel %vm319, %v453, 0
        %v534 = vsel %vm319, %v456, 0
        %v537 = vsel %vm319, %v459, 0
        %v540 = vsel %vm319, %v462, 0
        %542 = vmatpush.xpose.msra.mxu0 %v540
        %543 = vmatpush.xpose.msra.mxu0 %v537
        %544 = vmatpush.xpose.msra.mxu0 %v534
        %545 = vmatpush.xpose.msra.mxu0 %v531
        %546 = vmatpush.xpose.msra.mxu0 %v528
        %547 = vmatpush.xpose.msra.mxu0 %v525
        %548 = vmatpush.xpose.msra.mxu0 %v522
        %549 = vmatpush.xpose.msra.mxu0 %v519
        %550 = vmatpush.xpose.msra.mxu0 %v516
        %551 = vmatpush.xpose.msra.mxu0 %v513
        %552 = vmatpush.xpose.msra.mxu0 %v510
        %553 = vmatpush.xpose.msra.mxu0 %v507
        %554 = vmatpush.xpose.msra.mxu0 %v504
        %555 = vmatpush.xpose.msra.mxu0 %v501
        %556 = vmatpush.xpose.msra.mxu0 %v498
        %557 = vmatpush.xpose.msra.mxu0 %v495
        %558 = vmatmul.f32.gmra.mxu0 %v492
        %v559 = vpop.f32.mrf.mxu0
        %v560 = vadd.f32 0.0, %v559
        %561 = vdwg.mxu0
        %562 = vst [vmem:[%s284] sm:$0xff] %v560
        %s563 = sand.u32 %s186, 1
        %s564 = scalar_lea.sflag [#allocation3], %s563
        %s565 = sand.u32 %s186, 1
        %s566 = smul.addr %s565, 8
        %s567 = scalar_lea.vmem [#allocation2], %s566
        // Predicated region
        $region49: #{tpu_custom_call.1} parent=47 // pred_check
          %p568 = pneg %p196
        $region50: #{tpu_custom_call.1} parent=47 // pred_check_branch
          %570 = sbr.rel (%p568) target = $region52
        $region51: #{tpu_custom_call.1} parent=47 // pred_region
          %572 = vsyncadd %s564, 0
          %s573 = smul.addr %s21, 8
          %s574 = scalar_lea.hbm %s7, %s573
          %s576 = sshll.u32 %s567, 4
          %s577 = int_to_ptr.vmem [resolvable:$true] %s576
          %s578 = sshll.u32 %s574, 4
          %s579 = int_to_ptr.hbm [resolvable:$true] %s578
          %581 = dma.vmem_to_hbm [thread:$0]  %s577, 128, %s579, %s564
        $region52: #{tpu_custom_call.1} parent=47 // pred_fallthru
          _
      $region48: #{tpu_custom_call.1} parent=5 // pred_fallthru
        _
      %p582 = scmp.le.s32.totalorder 2, %s16
      // Predicated region
      $region53: #{tpu_custom_call.1} parent=5 // pred_check
        %p583 = pneg %p582
      $region54: #{tpu_custom_call.1} parent=5 // pred_check_branch
        %585 = sbr.rel (%p583) target = $region56
      $region55: #{tpu_custom_call.1} parent=5 // pred_region
        %s586 = ssub.s32 %s16, 2
        // Predicated region
        $region57: #{tpu_custom_call.1} parent=55 // pred_check
          %p587 = pneg %p202
        $region58: #{tpu_custom_call.1} parent=55 // pred_check_branch
          %589 = sbr.rel (%p587) target = $region60
        $region59: #{tpu_custom_call.1} parent=55 // pred_region
          %s590 = sand.u32 %s187, 1
          %s591 = scalar_lea.sflag [#allocation3], %s590
          %s592 = sand.u32 %s187, 1
          %s593 = smul.addr %s592, 8
          %s594 = scalar_lea.vmem [#allocation2], %s593
          %596 = dma.done %s591, 128
        $region60: #{tpu_custom_call.1} parent=55 // pred_fallthru
          _
      $region56: #{tpu_custom_call.1} parent=5 // pred_fallthru
        _
    $region6: #{tpu_custom_call.1} parent=1 // loop_footer
      %s20 = sadd.s32 1, %s16
    $region7: #{tpu_custom_call.1} parent=1 // loop_footer_branch
      %15 = sbr.rel target = $region3
    $region8: #{tpu_custom_call.1} parent=1 // loop_exit
      _
    %597 = vsyncpa [#allocation3], 1
    %s598 = scalar_lea.sflag [#allocation3], 1
    %599 = vsyncpa %s598, 1

</llo_original>
